<compile_context>
chip_gen: v7x
topology: tpu7x:2x2x1
jax: 0.10.0
libtpu: 0.0.40
codegen_flags: <defaults>
</compile_context>

<pallas_src>
import jax
import jax.numpy as jnp
from jax import lax
from jax.experimental import pallas as pl
from jax.experimental.pallas import tpu as pltpu


def _largest_divisor(n, cap):
    for d in range(min(n, cap), 0, -1):
        if n % d == 0:
            return d
    return 1


def lstm_kernel(x_ref, h0_ref, c0_ref, wih_ref, whh_ref, b_ref,
                out_ref, hN_ref, cN_ref, xg_scr, h_scr, c_scr):
    """One (batch_block, time_chunk) grid step of the LSTM forward.

    x_ref   : (Tc, Bb, I)   bf16  input chunk
    wih_ref : (I, 4H)       bf16  gate columns ordered (i, f, o, g)
    whh_ref : (H, 4H)       bf16  same column order
    b_ref   : (1, 4H)       f32   b_ih + b_hh, same column order
    xg_scr  : (Tc, Bb, 4H)  f32   hoisted input projection for this chunk
    h_scr/c_scr : (Bb, H)   f32   recurrent carry across time chunks
    """
    Tc, Bb, H = out_ref.shape
    I = x_ref.shape[-1]
    t_chunk = pl.program_id(1)

    # Reset the carry at the start of each batch block's time sweep.
    @pl.when(t_chunk == 0)
    def _():
        h_scr[...] = h0_ref[0]
        c_scr[...] = c0_ref[0]

    # Non-recurrent pass: project the whole chunk at once on the MXU
    # (bf16 inputs, f32 accumulation), then index xg_scr[t] per step.
    x2 = x_ref[...].reshape(Tc * Bb, I)
    xg = jnp.dot(x2, wih_ref[...], preferred_element_type=jnp.float32) + b_ref[...]
    xg_scr[...] = xg.reshape(Tc, Bb, 4 * H)

    whh = whh_ref[...]                     # (H, 4H) bf16, loop-invariant

    # Tiny-H case: the (Bb, 4H) gates tensor is a single f32 vreg -> run the
    # EUP ops on the full vreg and slice after (avoids masked sub-vreg operands).
    full_vreg_gates = (4 * H) <= 128

    def step(t, carry):
        h, c = carry
        gates = xg_scr[t] + jnp.dot(h.astype(whh.dtype), whh,
                                    preferred_element_type=jnp.float32)
        if full_vreg_gates:
            sg = jax.nn.sigmoid(gates)                 # (Bb, 4H)
            g_g = jnp.tanh(gates)[:, 3 * H:]           # (Bb, H)
        else:
            sg = jax.nn.sigmoid(gates[:, :3 * H])      # contiguous (i, f, o)
            g_g = jnp.tanh(gates[:, 3 * H:])
        i_g = sg[:, 0:H]
        f_g = sg[:, H:2 * H]
        o_g = sg[:, 2 * H:3 * H]
        c_new = f_g * c + i_g * g_g
        h_new = o_g * jnp.tanh(c_new)
        out_ref[t] = h_new                             # VMEM store; chunk DMA'd back once
        return h_new, c_new

    # Tc is the (small, bounded) chunk length -> full unroll inside the chunk
    # keeps LLO scheduler visibility without blowing instruction memory.
    h_fin, c_fin = lax.fori_loop(0, Tc, step, (h_scr[...], c_scr[...]),
                                 unroll=True)
    h_scr[...] = h_fin
    c_scr[...] = c_fin
    hN_ref[0] = h_fin
    cN_ref[0] = c_fin


def document_encoder_forward(s, h0, c0, w_ih, w_hh, b_ih, b_hh, *,
                             time_chunk=None, batch_block=None,
                             mxu_dtype=jnp.bfloat16):
    """Pallas LSTM forward. Returns (output, hN, cN) matching nn.LSTM."""
    T, B, I = s.shape
    H = h0.shape[-1]

    # Gate blocks (PyTorch order i,f,g,o) -> (i,f,o,g) so sigmoid gates are
    # contiguous; fold both biases; pre-transpose for x @ W.
    perm = jnp.concatenate([
        jnp.arange(0 * H, 1 * H),   # i
        jnp.arange(1 * H, 2 * H),   # f
        jnp.arange(3 * H, 4 * H),   # o
        jnp.arange(2 * H, 3 * H),   # g
    ])
    wih_t = jnp.transpose(w_ih[perm]).astype(mxu_dtype)            # (I, 4H)
    whh_t = jnp.transpose(w_hh[perm]).astype(mxu_dtype)            # (H, 4H)
    bias = (b_ih + b_hh)[perm].reshape(1, 4 * H).astype(jnp.float32)
    x = s.astype(mxu_dtype)
    h0 = h0.astype(jnp.float32)
    c0 = c0.astype(jnp.float32)

    # ---- tiling ----
    if time_chunk is None:
        tc = _largest_divisor(T, 16)
    else:
        tc = _largest_divisor(T, time_chunk)
    if (batch_block is not None and B % batch_block == 0
            and (batch_block == B or batch_block % 8 == 0)):
        bb = batch_block
    elif B % 16 == 0:
        bb = B // 2          # >=2 batch blocks -> megacore "parallel" axis on v7x
    else:
        bb = B
    n_b, n_t = B // bb, T // tc

    out_shapes = (
        jax.ShapeDtypeStruct((T, B, H), jnp.float32),   # output
        jax.ShapeDtypeStruct((1, B, H), jnp.float32),   # hN
        jax.ShapeDtypeStruct((1, B, H), jnp.float32),   # cN
    )

    grid_spec = pltpu.PrefetchScalarGridSpec(
        num_scalar_prefetch=0,
        grid=(n_b, n_t),
        in_specs=[
            pl.BlockSpec((tc, bb, I), lambda b, t: (t, b, 0)),     # x chunk
            pl.BlockSpec((1, bb, H), lambda b, t: (0, b, 0)),      # h0
            pl.BlockSpec((1, bb, H), lambda b, t: (0, b, 0)),      # c0
            pl.BlockSpec((I, 4 * H), lambda b, t: (0, 0)),         # W_ih^T
            pl.BlockSpec((H, 4 * H), lambda b, t: (0, 0)),         # W_hh^T
            pl.BlockSpec((1, 4 * H), lambda b, t: (0, 0)),         # bias
        ],
        out_specs=(
            pl.BlockSpec((tc, bb, H), lambda b, t: (t, b, 0)),     # output chunk
            pl.BlockSpec((1, bb, H), lambda b, t: (0, b, 0)),      # hN
            pl.BlockSpec((1, bb, H), lambda b, t: (0, b, 0)),      # cN
        ),
        scratch_shapes=[
            pltpu.VMEM((tc, bb, 4 * H), jnp.float32),   # hoisted input projection
            pltpu.VMEM((bb, H), jnp.float32),           # h carry
            pltpu.VMEM((bb, H), jnp.float32),           # c carry
        ],
    )

    # Explicit VMEM budget (double-buffered blocks + scratch, 2x headroom),
    # clamped so it is valid on v7x (64 MiB physical) and above v5e's 16 MiB
    # scoped default.
    itm = jnp.dtype(mxu_dtype).itemsize
    blk_bytes = (
        2 * tc * bb * I * itm                       # x chunk
        + 2 * tc * bb * H * 4                       # output chunk
        + 2 * 4 * bb * H * 4                        # h0/c0/hN/cN blocks
        + 2 * ((I + H) * 4 * H * itm + 4 * H * 4)   # weights + bias
        + tc * bb * 4 * H * 4 + 2 * bb * H * 4      # scratch
    )
    vmem_limit = int(min(max(2 * blk_bytes + (8 << 20), 32 << 20), 64 << 20))

    cost = pl.CostEstimate(
        flops=int(2 * T * B * (I + H) * 4 * H),
        transcendentals=int(5 * T * B * H),
        bytes_accessed=int(T * B * I * itm + (I + H) * 4 * H * itm + 4 * H * 4
                           + T * B * H * 4 + 4 * B * H * 4),
    )

    output, hN, cN = pl.pallas_call(
        lstm_kernel,
        out_shape=out_shapes,
        grid_spec=grid_spec,
        compiler_params=pltpu.CompilerParams(
            dimension_semantics=("parallel", "arbitrary"),
            vmem_limit_bytes=vmem_limit),
        cost_estimate=cost,
    )(x, h0, c0, wih_t, whh_t, bias)
    return output, hN, cN


def lstm_reference(s, h0, c0, w_ih, w_hh, b_ih, b_hh):
    """Pure-JAX f32 reference (PyTorch nn.LSTM semantics, gate order i,f,g,o)."""
    H = h0.shape[-1]

    def step(carry, x_t):
        h, c = carry
        gates = x_t @ w_ih.T + b_ih + h @ w_hh.T + b_hh
        i = jax.nn.sigmoid(gates[:, 0:H])
        f = jax.nn.sigmoid(gates[:, H:2 * H])
        g = jnp.tanh(gates[:, 2 * H:3 * H])
        o = jax.nn.sigmoid(gates[:, 3 * H:4 * H])
        c_new = f * c + i * g
        h_new = o * jnp.tanh(c_new)
        return (h_new, c_new), h_new

    (hN, cN), out = lax.scan(step, (h0[0], c0[0]), s)
    return out, hN[None], cN[None]


if __name__ == "__main__":
    SEQ_LEN, BATCH, INPUT_SIZE, HIDDEN_SIZE = 8, 8, 32, 32
    NUM_LAYERS = 1

    key = jax.random.PRNGKey(0)
    k_s, k_wih, k_whh, k_bih, k_bhh = jax.random.split(key, 5)

    # PyTorch LSTM init: U(-1/sqrt(H), 1/sqrt(H)).
    bound = 1.0 / jnp.sqrt(jnp.float32(HIDDEN_SIZE))
    w_ih = jax.random.uniform(k_wih, (4 * HIDDEN_SIZE, INPUT_SIZE),
                              jnp.float32, -bound, bound)
    w_hh = jax.random.uniform(k_whh, (4 * HIDDEN_SIZE, HIDDEN_SIZE),
                              jnp.float32, -bound, bound)
    b_ih = jax.random.uniform(k_bih, (4 * HIDDEN_SIZE,), jnp.float32, -bound, bound)
    b_hh = jax.random.uniform(k_bhh, (4 * HIDDEN_SIZE,), jnp.float32, -bound, bound)

    # Inputs: s is (seq_len, batch, input_size); h0/c0 from init_h0c0 (zeros).
    s = jax.random.normal(k_s, (SEQ_LEN, BATCH, INPUT_SIZE), jnp.float32)
    h0 = jnp.zeros((NUM_LAYERS, BATCH, HIDDEN_SIZE), jnp.float32)
    c0 = jnp.zeros((NUM_LAYERS, BATCH, HIDDEN_SIZE), jnp.float32)

    # time_chunk=4 exercises the cross-chunk h/c carry (grid = (1, 2)).
    out, hN, cN = document_encoder_forward(s, h0, c0, w_ih, w_hh, b_ih, b_hh,
                                           time_chunk=4)
    jax.block_until_ready((out, hN, cN))

    # Correctness check against a pure-JAX f32 reference.  Tolerance loosened
    # (vs. 1e-5) because the kernel intentionally uses bf16 MXU inputs.
    out_ref, hN_ref, cN_ref = lstm_reference(s, h0, c0, w_ih, w_hh, b_ih, b_hh)
    assert jnp.allclose(out, out_ref, atol=3e-2, rtol=3e-2)
    assert jnp.allclose(hN, hN_ref, atol=3e-2, rtol=3e-2)
    assert jnp.allclose(cN, cN_ref, atol=3e-2, rtol=3e-2)

    print("KERNEL_OK")
</pallas_src>

<mosaic_0001>
module attributes {stable_mosaic.version = 11 : i64} {
  func.func @lstm_kernel(%arg0: i32, %arg1: i32, %arg2: memref<4x8x32xbf16, #tpu.memory_space<vmem>>, %arg3: memref<1x8x32xf32, #tpu.memory_space<vmem>>, %arg4: memref<1x8x32xf32, #tpu.memory_space<vmem>>, %arg5: memref<32x128xbf16, #tpu.memory_space<vmem>>, %arg6: memref<32x128xbf16, #tpu.memory_space<vmem>>, %arg7: memref<1x128xf32, #tpu.memory_space<vmem>>, %arg8: memref<4x8x32xf32, #tpu.memory_space<vmem>>, %arg9: memref<1x8x32xf32, #tpu.memory_space<vmem>>, %arg10: memref<1x8x32xf32, #tpu.memory_space<vmem>>, %arg11: memref<4x8x128xf32, #tpu.memory_space<vmem>>, %arg12: memref<8x32xf32, #tpu.memory_space<vmem>>, %arg13: memref<8x32xf32, #tpu.memory_space<vmem>>) attributes {dimension_semantics = [#tpu.dimension_semantics<parallel>, #tpu.dimension_semantics<arbitrary>], iteration_bounds = array<i64: 1, 2>, scalar_prefetch = 0 : i64, scratch_operands = 3 : i64, tpu.core_type = #tpu.core_type<tc>, window_params = [{transform_indices = @transform_0, window_bounds = array<i64: 4, 8, 32>}, {transform_indices = @transform_1, window_bounds = array<i64: 1, 8, 32>}, {transform_indices = @transform_2, window_bounds = array<i64: 1, 8, 32>}, {pipeline_mode = #tpu.pipeline_mode<synchronous>, transform_indices = @transform_3, window_bounds = array<i64: 32, 128>}, {pipeline_mode = #tpu.pipeline_mode<synchronous>, transform_indices = @transform_4, window_bounds = array<i64: 32, 128>}, {pipeline_mode = #tpu.pipeline_mode<synchronous>, transform_indices = @transform_5, window_bounds = array<i64: 1, 128>}, {transform_indices = @transform_6, window_bounds = array<i64: 4, 8, 32>}, {transform_indices = @transform_7, window_bounds = array<i64: 1, 8, 32>}, {transform_indices = @transform_8, window_bounds = array<i64: 1, 8, 32>}]} {
    %c0_i32 = arith.constant 0 : i32
    %0 = arith.cmpi eq, %arg1, %c0_i32 : i32
    %1 = arith.extui %0 : i1 to i32
    %c0_i32_0 = arith.constant 0 : i32
    %2 = arith.cmpi ne, %1, %c0_i32_0 : i32
    scf.if %2 {
      %c0_51 = arith.constant 0 : index
      %c0_52 = arith.constant 0 : index
      %c0_53 = arith.constant 0 : index
      %123 = vector.load %arg3[%c0_51, %c0_52, %c0_53] : memref<1x8x32xf32, #tpu.memory_space<vmem>>, vector<1x8x32xf32>
      %124 = vector.shape_cast %123 : vector<1x8x32xf32> to vector<8x32xf32>
      %c0_54 = arith.constant 0 : index
      %c0_55 = arith.constant 0 : index
      %125 = vector.load %arg12[%c0_54, %c0_55] : memref<8x32xf32, #tpu.memory_space<vmem>>, vector<8x32xf32>
      tpu.vector_store %arg12[%c0_54, %c0_55], %124 {strides = array<i32>} : memref<8x32xf32, #tpu.memory_space<vmem>>, vector<8x32xf32>,
      %c0_56 = arith.constant 0 : index
      %c0_57 = arith.constant 0 : index
      %c0_58 = arith.constant 0 : index
      %126 = vector.load %arg4[%c0_56, %c0_57, %c0_58] : memref<1x8x32xf32, #tpu.memory_space<vmem>>, vector<1x8x32xf32>
      %127 = vector.shape_cast %126 : vector<1x8x32xf32> to vector<8x32xf32>
      %c0_59 = arith.constant 0 : index
      %c0_60 = arith.constant 0 : index
      %128 = vector.load %arg13[%c0_59, %c0_60] : memref<8x32xf32, #tpu.memory_space<vmem>>, vector<8x32xf32>
      tpu.vector_store %arg13[%c0_59, %c0_60], %127 {strides = array<i32>} : memref<8x32xf32, #tpu.memory_space<vmem>>, vector<8x32xf32>,
    } else {
    }
    %c0 = arith.constant 0 : index
    %c0_1 = arith.constant 0 : index
    %c0_2 = arith.constant 0 : index
    %3 = vector.load %arg2[%c0, %c0_1, %c0_2] : memref<4x8x32xbf16, #tpu.memory_space<vmem>>, vector<4x8x32xbf16>
    %4 = vector.shape_cast %3 : vector<4x8x32xbf16> to vector<32x32xbf16>
    %c0_3 = arith.constant 0 : index
    %c0_4 = arith.constant 0 : index
    %5 = vector.load %arg5[%c0_3, %c0_4] : memref<32x128xbf16, #tpu.memory_space<vmem>>, vector<32x128xbf16>
    %cst = arith.constant dense<0.000000e+00> : vector<32x128xf32>
    %6 = tpu.matmul %4, %5, %cst {dimension_numbers = #tpu.dot_dimension_numbers<[1], [0], [0], [1], [0, 0, 1, 1], [], []>} : vector<32x32xbf16>, vector<32x128xbf16>, vector<32x128xf32> -> vector<32x128xf32>
    %c0_5 = arith.constant 0 : index
    %c0_6 = arith.constant 0 : index
    %7 = vector.load %arg7[%c0_5, %c0_6] : memref<1x128xf32, #tpu.memory_space<vmem>>, vector<1x128xf32>
    %8 = vector.broadcast %7 : vector<1x128xf32> to vector<32x128xf32>
    %9 = arith.addf %6, %8 : vector<32x128xf32>
    %10 = vector.shape_cast %9 : vector<32x128xf32> to vector<4x8x128xf32>
    %c0_7 = arith.constant 0 : index
    %c0_8 = arith.constant 0 : index
    %c0_9 = arith.constant 0 : index
    %11 = vector.load %arg11[%c0_7, %c0_8, %c0_9] : memref<4x8x128xf32, #tpu.memory_space<vmem>>, vector<4x8x128xf32>
    tpu.vector_store %arg11[%c0_7, %c0_8, %c0_9], %10 {strides = array<i32>} : memref<4x8x128xf32, #tpu.memory_space<vmem>>, vector<4x8x128xf32>,
    %c0_10 = arith.constant 0 : index
    %c0_11 = arith.constant 0 : index
    %12 = vector.load %arg6[%c0_10, %c0_11] : memref<32x128xbf16, #tpu.memory_space<vmem>>, vector<32x128xbf16>
    %c0_12 = arith.constant 0 : index
    %c0_13 = arith.constant 0 : index
    %13 = vector.load %arg12[%c0_12, %c0_13] : memref<8x32xf32, #tpu.memory_space<vmem>>, vector<8x32xf32>
    %c0_14 = arith.constant 0 : index
    %c0_15 = arith.constant 0 : index
    %14 = vector.load %arg13[%c0_14, %c0_15] : memref<8x32xf32, #tpu.memory_space<vmem>>, vector<8x32xf32>
    %c0_i32_16 = arith.constant 0 : i32
    %15 = arith.index_cast %c0_i32_16 : i32 to index
    %c0_17 = arith.constant 0 : index
    %c0_18 = arith.constant 0 : index
    %16 = vector.load %arg11[%15, %c0_17, %c0_18] : memref<4x8x128xf32, #tpu.memory_space<vmem>>, vector<1x8x128xf32>
    %17 = vector.shape_cast %16 : vector<1x8x128xf32> to vector<8x128xf32>
    %18 = arith.truncf %13 : vector<8x32xf32> to vector<8x32xbf16>
    %cst_19 = arith.constant dense<0.000000e+00> : vector<8x128xf32>
    %19 = tpu.matmul %18, %12, %cst_19 {dimension_numbers = #tpu.dot_dimension_numbers<[1], [0], [0], [1], [0, 0, 1, 1], [], []>} : vector<8x32xbf16>, vector<32x128xbf16>, vector<8x128xf32> -> vector<8x128xf32>
    %20 = arith.addf %17, %19 : vector<8x128xf32>
    %21 = arith.negf %20 : vector<8x128xf32>
    %22 = math.exp %21 : vector<8x128xf32>
    %cst_20 = arith.constant 1.000000e+00 : f32
    %23 = vector.broadcast %cst_20 : f32 to vector<8x128xf32>
    %24 = arith.addf %23, %22 : vector<8x128xf32>
    %25 = arith.divf %23, %24 : vector<8x128xf32>
    %26 = math.tanh %20 : vector<8x128xf32>
    %27 = vector.extract_strided_slice %26 {offsets = [0, 96], sizes = [8, 32], strides = [1, 1]} : vector<8x128xf32> to vector<8x32xf32>
    %28 = vector.extract_strided_slice %25 {offsets = [0, 0], sizes = [8, 32], strides = [1, 1]} : vector<8x128xf32> to vector<8x32xf32>
    %29 = vector.extract_strided_slice %25 {offsets = [0, 32], sizes = [8, 32], strides = [1, 1]} : vector<8x128xf32> to vector<8x32xf32>
    %30 = vector.extract_strided_slice %25 {offsets = [0, 64], sizes = [8, 32], strides = [1, 1]} : vector<8x128xf32> to vector<8x32xf32>
    %31 = arith.mulf %29, %14 : vector<8x32xf32>
    %32 = arith.mulf %28, %27 : vector<8x32xf32>
    %33 = arith.addf %31, %32 : vector<8x32xf32>
    %34 = math.tanh %33 : vector<8x32xf32>
    %35 = arith.mulf %30, %34 : vector<8x32xf32>
    %36 = arith.index_cast %c0_i32_16 : i32 to index
    %c0_21 = arith.constant 0 : index
    %c0_22 = arith.constant 0 : index
    %37 = vector.load %arg8[%36, %c0_21, %c0_22] : memref<4x8x32xf32, #tpu.memory_space<vmem>>, vector<1x8x32xf32>
    %38 = vector.shape_cast %37 : vector<1x8x32xf32> to vector<8x32xf32>
    %39 = vector.shape_cast %35 : vector<8x32xf32> to vector<1x8x32xf32>
    tpu.vector_store %arg8[%36, %c0_21, %c0_22], %39 {strides = array<i32>} : memref<4x8x32xf32, #tpu.memory_space<vmem>>, vector<1x8x32xf32>,
    %c1_i32 = arith.constant 1 : i32
    %40 = arith.index_cast %c1_i32 : i32 to index
    %c0_23 = arith.constant 0 : index
    %c0_24 = arith.constant 0 : index
    %41 = vector.load %arg11[%40, %c0_23, %c0_24] : memref<4x8x128xf32, #tpu.memory_space<vmem>>, vector<1x8x128xf32>
    %42 = vector.shape_cast %41 : vector<1x8x128xf32> to vector<8x128xf32>
    %43 = arith.truncf %35 : vector<8x32xf32> to vector<8x32xbf16>
    %cst_25 = arith.constant dense<0.000000e+00> : vector<8x128xf32>
    %44 = tpu.matmul %43, %12, %cst_25 {dimension_numbers = #tpu.dot_dimension_numbers<[1], [0], [0], [1], [0, 0, 1, 1], [], []>} : vector<8x32xbf16>, vector<32x128xbf16>, vector<8x128xf32> -> vector<8x128xf32>
    %45 = arith.addf %42, %44 : vector<8x128xf32>
    %46 = arith.negf %45 : vector<8x128xf32>
    %47 = math.exp %46 : vector<8x128xf32>
    %cst_26 = arith.constant 1.000000e+00 : f32
    %48 = vector.broadcast %cst_26 : f32 to vector<8x128xf32>
    %49 = arith.addf %48, %47 : vector<8x128xf32>
    %50 = arith.divf %48, %49 : vector<8x128xf32>
    %51 = math.tanh %45 : vector<8x128xf32>
    %52 = vector.extract_strided_slice %51 {offsets = [0, 96], sizes = [8, 32], strides = [1, 1]} : vector<8x128xf32> to vector<8x32xf32>
    %53 = vector.extract_strided_slice %50 {offsets = [0, 0], sizes = [8, 32], strides = [1, 1]} : vector<8x128xf32> to vector<8x32xf32>
    %54 = vector.extract_strided_slice %50 {offsets = [0, 32], sizes = [8, 32], strides = [1, 1]} : vector<8x128xf32> to vector<8x32xf32>
    %55 = vector.extract_strided_slice %50 {offsets = [0, 64], sizes = [8, 32], strides = [1, 1]} : vector<8x128xf32> to vector<8x32xf32>
    %56 = arith.mulf %54, %33 : vector<8x32xf32>
    %57 = arith.mulf %53, %52 : vector<8x32xf32>
    %58 = arith.addf %56, %57 : vector<8x32xf32>
    %59 = math.tanh %58 : vector<8x32xf32>
    %60 = arith.mulf %55, %59 : vector<8x32xf32>
    %61 = arith.index_cast %c1_i32 : i32 to index
    %c0_27 = arith.constant 0 : index
    %c0_28 = arith.constant 0 : index
    %62 = vector.load %arg8[%61, %c0_27, %c0_28] : memref<4x8x32xf32, #tpu.memory_space<vmem>>, vector<1x8x32xf32>
    %63 = vector.shape_cast %62 : vector<1x8x32xf32> to vector<8x32xf32>
    %64 = vector.shape_cast %60 : vector<8x32xf32> to vector<1x8x32xf32>
    tpu.vector_store %arg8[%61, %c0_27, %c0_28], %64 {strides = array<i32>} : memref<4x8x32xf32, #tpu.memory_space<vmem>>, vector<1x8x32xf32>,
    %c2_i32 = arith.constant 2 : i32
    %65 = arith.index_cast %c2_i32 : i32 to index
    %c0_29 = arith.constant 0 : index
    %c0_30 = arith.constant 0 : index
    %66 = vector.load %arg11[%65, %c0_29, %c0_30] : memref<4x8x128xf32, #tpu.memory_space<vmem>>, vector<1x8x128xf32>
    %67 = vector.shape_cast %66 : vector<1x8x128xf32> to vector<8x128xf32>
    %68 = arith.truncf %60 : vector<8x32xf32> to vector<8x32xbf16>
    %cst_31 = arith.constant dense<0.000000e+00> : vector<8x128xf32>
    %69 = tpu.matmul %68, %12, %cst_31 {dimension_numbers = #tpu.dot_dimension_numbers<[1], [0], [0], [1], [0, 0, 1, 1], [], []>} : vector<8x32xbf16>, vector<32x128xbf16>, vector<8x128xf32> -> vector<8x128xf32>
    %70 = arith.addf %67, %69 : vector<8x128xf32>
    %71 = arith.negf %70 : vector<8x128xf32>
    %72 = math.exp %71 : vector<8x128xf32>
    %cst_32 = arith.constant 1.000000e+00 : f32
    %73 = vector.broadcast %cst_32 : f32 to vector<8x128xf32>
    %74 = arith.addf %73, %72 : vector<8x128xf32>
    %75 = arith.divf %73, %74 : vector<8x128xf32>
    %76 = math.tanh %70 : vector<8x128xf32>
    %77 = vector.extract_strided_slice %76 {offsets = [0, 96], sizes = [8, 32], strides = [1, 1]} : vector<8x128xf32> to vector<8x32xf32>
    %78 = vector.extract_strided_slice %75 {offsets = [0, 0], sizes = [8, 32], strides = [1, 1]} : vector<8x128xf32> to vector<8x32xf32>
    %79 = vector.extract_strided_slice %75 {offsets = [0, 32], sizes = [8, 32], strides = [1, 1]} : vector<8x128xf32> to vector<8x32xf32>
    %80 = vector.extract_strided_slice %75 {offsets = [0, 64], sizes = [8, 32], strides = [1, 1]} : vector<8x128xf32> to vector<8x32xf32>
    %81 = arith.mulf %79, %58 : vector<8x32xf32>
    %82 = arith.mulf %78, %77 : vector<8x32xf32>
    %83 = arith.addf %81, %82 : vector<8x32xf32>
    %84 = math.tanh %83 : vector<8x32xf32>
    %85 = arith.mulf %80, %84 : vector<8x32xf32>
    %86 = arith.index_cast %c2_i32 : i32 to index
    %c0_33 = arith.constant 0 : index
    %c0_34 = arith.constant 0 : index
    %87 = vector.load %arg8[%86, %c0_33, %c0_34] : memref<4x8x32xf32, #tpu.memory_space<vmem>>, vector<1x8x32xf32>
    %88 = vector.shape_cast %87 : vector<1x8x32xf32> to vector<8x32xf32>
    %89 = vector.shape_cast %85 : vector<8x32xf32> to vector<1x8x32xf32>
    tpu.vector_store %arg8[%86, %c0_33, %c0_34], %89 {strides = array<i32>} : memref<4x8x32xf32, #tpu.memory_space<vmem>>, vector<1x8x32xf32>,
    %c3_i32 = arith.constant 3 : i32
    %90 = arith.index_cast %c3_i32 : i32 to index
    %c0_35 = arith.constant 0 : index
    %c0_36 = arith.constant 0 : index
    %91 = vector.load %arg11[%90, %c0_35, %c0_36] : memref<4x8x128xf32, #tpu.memory_space<vmem>>, vector<1x8x128xf32>
    %92 = vector.shape_cast %91 : vector<1x8x128xf32> to vector<8x128xf32>
    %93 = arith.truncf %85 : vector<8x32xf32> to vector<8x32xbf16>
    %cst_37 = arith.constant dense<0.000000e+00> : vector<8x128xf32>
    %94 = tpu.matmul %93, %12, %cst_37 {dimension_numbers = #tpu.dot_dimension_numbers<[1], [0], [0], [1], [0, 0, 1, 1], [], []>} : vector<8x32xbf16>, vector<32x128xbf16>, vector<8x128xf32> -> vector<8x128xf32>
    %95 = arith.addf %92, %94 : vector<8x128xf32>
    %96 = arith.negf %95 : vector<8x128xf32>
    %97 = math.exp %96 : vector<8x128xf32>
    %cst_38 = arith.constant 1.000000e+00 : f32
    %98 = vector.broadcast %cst_38 : f32 to vector<8x128xf32>
    %99 = arith.addf %98, %97 : vector<8x128xf32>
    %100 = arith.divf %98, %99 : vector<8x128xf32>
    %101 = math.tanh %95 : vector<8x128xf32>
    %102 = vector.extract_strided_slice %101 {offsets = [0, 96], sizes = [8, 32], strides = [1, 1]} : vector<8x128xf32> to vector<8x32xf32>
    %103 = vector.extract_strided_slice %100 {offsets = [0, 0], sizes = [8, 32], strides = [1, 1]} : vector<8x128xf32> to vector<8x32xf32>
    %104 = vector.extract_strided_slice %100 {offsets = [0, 32], sizes = [8, 32], strides = [1, 1]} : vector<8x128xf32> to vector<8x32xf32>
    %105 = vector.extract_strided_slice %100 {offsets = [0, 64], sizes = [8, 32], strides = [1, 1]} : vector<8x128xf32> to vector<8x32xf32>
    %106 = arith.mulf %104, %83 : vector<8x32xf32>
    %107 = arith.mulf %103, %102 : vector<8x32xf32>
    %108 = arith.addf %106, %107 : vector<8x32xf32>
    %109 = math.tanh %108 : vector<8x32xf32>
    %110 = arith.mulf %105, %109 : vector<8x32xf32>
    %111 = arith.index_cast %c3_i32 : i32 to index
    %c0_39 = arith.constant 0 : index
    %c0_40 = arith.constant 0 : index
    %112 = vector.load %arg8[%111, %c0_39, %c0_40] : memref<4x8x32xf32, #tpu.memory_space<vmem>>, vector<1x8x32xf32>
    %113 = vector.shape_cast %112 : vector<1x8x32xf32> to vector<8x32xf32>
    %114 = vector.shape_cast %110 : vector<8x32xf32> to vector<1x8x32xf32>
    tpu.vector_store %arg8[%111, %c0_39, %c0_40], %114 {strides = array<i32>} : memref<4x8x32xf32, #tpu.memory_space<vmem>>, vector<1x8x32xf32>,
    %c4_i32 = arith.constant 4 : i32
    %c0_41 = arith.constant 0 : index
    %c0_42 = arith.constant 0 : index
    %115 = vector.load %arg12[%c0_41, %c0_42] : memref<8x32xf32, #tpu.memory_space<vmem>>, vector<8x32xf32>
    tpu.vector_store %arg12[%c0_41, %c0_42], %110 {strides = array<i32>} : memref<8x32xf32, #tpu.memory_space<vmem>>, vector<8x32xf32>,
    %c0_43 = arith.constant 0 : index
    %c0_44 = arith.constant 0 : index
    %116 = vector.load %arg13[%c0_43, %c0_44] : memref<8x32xf32, #tpu.memory_space<vmem>>, vector<8x32xf32>
    tpu.vector_store %arg13[%c0_43, %c0_44], %108 {strides = array<i32>} : memref<8x32xf32, #tpu.memory_space<vmem>>, vector<8x32xf32>,
    %c0_45 = arith.constant 0 : index
    %c0_46 = arith.constant 0 : index
    %c0_47 = arith.constant 0 : index
    %117 = vector.load %arg9[%c0_45, %c0_46, %c0_47] : memref<1x8x32xf32, #tpu.memory_space<vmem>>, vector<1x8x32xf32>
    %118 = vector.shape_cast %117 : vector<1x8x32xf32> to vector<8x32xf32>
    %119 = vector.shape_cast %110 : vector<8x32xf32> to vector<1x8x32xf32>
    tpu.vector_store %arg9[%c0_45, %c0_46, %c0_47], %119 {strides = array<i32>} : memref<1x8x32xf32, #tpu.memory_space<vmem>>, vector<1x8x32xf32>,
    %c0_48 = arith.constant 0 : index
    %c0_49 = arith.constant 0 : index
    %c0_50 = arith.constant 0 : index
    %120 = vector.load %arg10[%c0_48, %c0_49, %c0_50] : memref<1x8x32xf32, #tpu.memory_space<vmem>>, vector<1x8x32xf32>
    %121 = vector.shape_cast %120 : vector<1x8x32xf32> to vector<8x32xf32>
    %122 = vector.shape_cast %108 : vector<8x32xf32> to vector<1x8x32xf32>
    tpu.vector_store %arg10[%c0_48, %c0_49, %c0_50], %122 {strides = array<i32>} : memref<1x8x32xf32, #tpu.memory_space<vmem>>, vector<1x8x32xf32>,
    return
  }
  func.func @transform_0(%arg0: i32, %arg1: i32) -> (i32, i32, i32) {
    %c0_i32 = arith.constant 0 : i32
    %c0_i32_0 = arith.constant 0 : i32
    return %arg1, %arg0, %c0_i32 : i32, i32, i32
  }
  func.func @transform_1(%arg0: i32, %arg1: i32) -> (i32, i32, i32) {
    %c0_i32 = arith.constant 0 : i32
    %c0_i32_0 = arith.constant 0 : i32
    %c0_i32_1 = arith.constant 0 : i32
    return %c0_i32, %arg0, %c0_i32_0 : i32, i32, i32
  }
  func.func @transform_2(%arg0: i32, %arg1: i32) -> (i32, i32, i32) {
    %c0_i32 = arith.constant 0 : i32
    %c0_i32_0 = arith.constant 0 : i32
    %c0_i32_1 = arith.constant 0 : i32
    return %c0_i32, %arg0, %c0_i32_0 : i32, i32, i32
  }
  func.func @transform_3(%arg0: i32, %arg1: i32) -> (i32, i32) {
    %c0_i32 = arith.constant 0 : i32
    %c0_i32_0 = arith.constant 0 : i32
    %c0_i32_1 = arith.constant 0 : i32
    return %c0_i32, %c0_i32_0 : i32, i32
  }
  func.func @transform_4(%arg0: i32, %arg1: i32) -> (i32, i32) {
    %c0_i32 = arith.constant 0 : i32
    %c0_i32_0 = arith.constant 0 : i32
    %c0_i32_1 = arith.constant 0 : i32
    return %c0_i32, %c0_i32_0 : i32, i32
  }
  func.func @transform_5(%arg0: i32, %arg1: i32) -> (i32, i32) {
    %c0_i32 = arith.constant 0 : i32
    %c0_i32_0 = arith.constant 0 : i32
    %c0_i32_1 = arith.constant 0 : i32
    return %c0_i32, %c0_i32_0 : i32, i32
  }
  func.func @transform_6(%arg0: i32, %arg1: i32) -> (i32, i32, i32) {
    %c0_i32 = arith.constant 0 : i32
    %c0_i32_0 = arith.constant 0 : i32
    return %arg1, %arg0, %c0_i32 : i32, i32, i32
  }
  func.func @transform_7(%arg0: i32, %arg1: i32) -> (i32, i32, i32) {
    %c0_i32 = arith.constant 0 : i32
    %c0_i32_0 = arith.constant 0 : i32
    %c0_i32_1 = arith.constant 0 : i32
    return %c0_i32, %arg0, %c0_i32_0 : i32, i32, i32
  }
  func.func @transform_8(%arg0: i32, %arg1: i32) -> (i32, i32, i32) {
    %c0_i32 = arith.constant 0 : i32
    %c0_i32_0 = arith.constant 0 : i32
    %c0_i32_1 = arith.constant 0 : i32
    return %c0_i32, %arg0, %c0_i32_0 : i32, i32, i32
  }
}

</mosaic_0001>

<llo_original>
// kernel: tpu_custom_call.1
$region0: #{tpu_custom_call.1}
  #allocation0 [shape = 'u32[]', space=smem, size = 0x4, offset = 0x4, fixed_abs, tag = 'smem constant byte address 0x4 - core index']
  #allocation1 [shape = 'u32[144,128]{1,0:T(1,128)}', space=vmem, size = 0x12000, scoped, tag = 'internal scratch']
  #allocation2 [shape = 'f32[4,8,128]{2,1,0:T(8,128)}', space=vmem, size = 0x4000, scoped, tag = 'scratch operand']
  #allocation3 [shape = 'f32[8,32]{1,0:T(8,128)}', space=vmem, size = 0x1000, scoped, tag = 'scratch operand']
  #allocation4 [shape = 'f32[8,32]{1,0:T(8,128)}', space=vmem, size = 0x1000, scoped, tag = 'scratch operand']
  %s0 = inlined_call_operand.hbm [shape: bf16[8,8,32], index: 0, kind: input, shape index: {}]
  %s1 = inlined_call_operand.hbm [shape: f32[1,8,32], index: 1, kind: input, shape index: {}]
  %s2 = inlined_call_operand.hbm [shape: f32[1,8,32], index: 2, kind: input, shape index: {}]
  %s3 = inlined_call_operand.hbm [shape: bf16[32,128], index: 3, kind: input, shape index: {}]
  %s4 = inlined_call_operand.hbm [shape: bf16[32,128], index: 4, kind: input, shape index: {}]
  %s5 = inlined_call_operand.vmem [shape: f32[1,128], index: 5, kind: input, shape index: {}]
  %s6 = inlined_call_operand.hbm [shape: f32[8,8,32], index: 6, kind: output, shape index: {0}]
  %s7 = inlined_call_operand.hbm [shape: f32[1,8,32], index: 7, kind: output, shape index: {1}]
  %s8 = inlined_call_operand.hbm [shape: f32[1,8,32], index: 8, kind: output, shape index: {2}]
  %9 = xla_tuple %s6, %s7, %s8
  %s10 = sld [smem:[#allocation0]]
  $region97: #{tpu_custom_call.1} parent=0
    _
  %s12 = ssub.s32 1, %s10
  %s13 = scalar_select 0, %s12, %s10
  $region1: #{tpu_custom_call.1} parent=0
    #allocation5 [shape = 'u8[16384]{0}', space=vmem, size = 0x4000, scoped, tag = 'input window, operand 0']
    #allocation6 [shape = 's32[2]{0}', space=sflag, size = 0x8, scoped, tag = 'scoped memory for tpu_custom_call.1']
    #allocation7 [shape = 's32[2]{0}', space=sflag, size = 0x8, scoped, tag = 'scoped memory for tpu_custom_call.1']
    #allocation8 [shape = 'u8[4096]{0}', space=vmem, size = 0x1000, scoped, tag = 'input window, operand 1, single buffered']
    #allocation9 [shape = 's32[1]{0}', space=sflag, size = 0x4, scoped, tag = 'scoped memory for tpu_custom_call.1']
    #allocation10 [shape = 'u8[4096]{0}', space=vmem, size = 0x1000, scoped, tag = 'input window, operand 2, single buffered']
    #allocation11 [shape = 'u8[8192]{0}', space=vmem, size = 0x2000, scoped, tag = 'input window, operand 3, single buffered']
    #allocation12 [shape = 's32[1]{0}', space=sflag, size = 0x4, scoped, tag = 'scoped memory for tpu_custom_call.1']
    #allocation13 [shape = 'u8[8192]{0}', space=vmem, size = 0x2000, scoped, tag = 'input window, operand 4, single buffered']
    #allocation14 [shape = 'u8[32768]{0}', space=vmem, size = 0x8000, scoped, tag = 'output window, operand 0']
    #allocation15 [shape = 'u8[4096]{0}', space=vmem, size = 0x1000, scoped, tag = 'output window, operand 1, single buffered']
    #allocation16 [shape = 's32[1]{0}', space=sflag, size = 0x4, scoped, tag = 'scoped memory for tpu_custom_call.1']
    #allocation17 [shape = 'u8[4096]{0}', space=vmem, size = 0x1000, scoped, tag = 'output window, operand 2, single buffered']
    %14 = vsyncpa [#allocation6], 0
    %s15 = scalar_lea.sflag [#allocation6], 1
    %16 = vsyncpa %s15, 0
    %17 = vsyncpa [#allocation9], 0
    %18 = vsyncpa [#allocation12], 0
    %19 = vsyncpa [#allocation7], 0
    %s20 = scalar_lea.sflag [#allocation7], 1
    %21 = vsyncpa %s20, 0
    %22 = vsyncpa [#allocation16], 0
    loop: start=0, step=1, limit=4
    $region2: #{tpu_custom_call.1} parent=1 // loop_pre_header
      _
    $region3: #{tpu_custom_call.1} parent=1 // loop_header
      %s24 = sphi 0, %s28
      %p25 = scmp.ge.s32.totalorder %s24, 4
      %s31 = sphi 0, %s43
      %s32 = sphi 0, %s39
      %s33 = sphi 0, %s31
      %s34 = sphi 0, %s32
      %s35 = sphi 0, %s33
      %s36 = sphi 0, %s34
      %s48 = sphi 0, %s50
      %s51 = sphi 0, %s48
      %s52 = sphi 0, %s51
      %s68 = sphi 0, %s52
      %s74 = sphi 0, %s76
      %s77 = sphi 0, %s74
      %s78 = sphi 0, %s77
      %s94 = sphi 0, %s78
      %s100 = sphi 0, %s102
      %s103 = sphi 0, %s100
      %s104 = sphi 0, %s103
      %s120 = sphi 0, %s104
      %s124 = sphi 0, %s124
      %s126 = sphi 0, %s124
      %s127 = sphi 0, %s126
      %s141 = sphi 0, %s127
      %s145 = sphi 0, %s145
      %s147 = sphi 0, %s145
      %s148 = sphi 0, %s147
      %s162 = sphi 0, %s148
      %s166 = sphi 0, %s166
      %s168 = sphi 0, %s166
      %s169 = sphi 0, %s168
      %s183 = sphi 0, %s169
      %s191 = sphi 0, %s193
      %s194 = sphi 0, %s191
      %s195 = sphi 0, %s194
      %s211 = sphi 0, %s195
      %s217 = sphi 0, %s219
      %s220 = sphi 0, %s217
      %s221 = sphi 0, %s220
      %s237 = sphi 0, %s221
      %s243 = sphi 0, %s245
      %s246 = sphi 0, %s243
      %s247 = sphi 0, %s246
      %s263 = sphi 0, %s247
    $region4: #{tpu_custom_call.1} parent=1 // loop_header_branch
      %27 = sbr.rel (%p25) target = $region8
    $region5: #{tpu_custom_call.1} parent=1 // loop_body
      %s29 = ssub.s32 %s24, 1
      %s30 = ssub.s32 %s24, 2
      %s37 = sadd.s32 1, %s32
      %p38 = scmp.ge.s32.totalorder %s37, 2
      %s39 = scalar_select %p38, 0, %s37
      %s40 = sadd.s32 1, %s31
      %s41 = scalar_select %p38, %s40, %s31
      %p42 = scmp.ge.s32.totalorder %s41, 1
      %s43 = scalar_select %p42, 0, %s41
      %s44 = ssub.s32 %s32, %s39
      %s45 = ssub.s32 %s31, %s43
      %s46 = sor.u32 %s44, %s45
      %p47 = scmp.eq.s32.totalorder %s46, 0
      %s49 = sadd.s32 %s48, 1
      %s50 = scalar_select %p47, %s48, %s49
      %p53 = pneg %p47
      %p54 = scmp.eq.s32.totalorder %s24, 1
      %p55 = por %p53, %p54
      %p56 = scmp.ne.s32.totalorder %s48, %s51
      %p57 = scmp.eq.s32.totalorder %s24, 0
      %p58 = por %p56, %p57
      %p59 = scmp.ne.s32.totalorder %s48, %s51
      %p60 = scmp.eq.s32.totalorder %s29, 1
      %p61 = por %p59, %p60
      %p62 = scmp.ne.s32.totalorder %s51, %s52
      %p63 = scmp.eq.s32.totalorder %s29, 0
      %p64 = por %p62, %p63
      %p65 = scmp.ne.s32.totalorder %s51, %s52
      %p66 = scmp.eq.s32.totalorder %s30, 1
      %p67 = por %p65, %p66
      %p69 = scmp.ne.s32.totalorder %s52, %s68
      %p70 = scmp.eq.s32.totalorder %s30, 0
      %p71 = por %p69, %p70
      %s72 = ssub.s32 %s31, %s43
      %p73 = scmp.eq.s32.totalorder %s72, 0
      %s75 = sadd.s32 %s74, 1
      %s76 = scalar_select %p73, %s74, %s75
      %p79 = pneg %p73
      %p80 = scmp.eq.s32.totalorder %s24, 1
      %p81 = por %p79, %p80
      %p82 = scmp.ne.s32.totalorder %s74, %s77
      %p83 = scmp.eq.s32.totalorder %s24, 0
      %p84 = por %p82, %p83
      %p85 = scmp.ne.s32.totalorder %s74, %s77
      %p86 = scmp.eq.s32.totalorder %s29, 1
      %p87 = por %p85, %p86
      %p88 = scmp.ne.s32.totalorder %s77, %s78
      %p89 = scmp.eq.s32.totalorder %s29, 0
      %p90 = por %p88, %p89
      %p91 = scmp.ne.s32.totalorder %s77, %s78
      %p92 = scmp.eq.s32.totalorder %s30, 1
      %p93 = por %p91, %p92
      %p95 = scmp.ne.s32.totalorder %s78, %s94
      %p96 = scmp.eq.s32.totalorder %s30, 0
      %p97 = por %p95, %p96
      %s98 = ssub.s32 %s31, %s43
      %p99 = scmp.eq.s32.totalorder %s98, 0
      %s101 = sadd.s32 %s100, 1
      %s102 = scalar_select %p99, %s100, %s101
      %p105 = pneg %p99
      %p106 = scmp.eq.s32.totalorder %s24, 1
      %p107 = por %p105, %p106
      %p108 = scmp.ne.s32.totalorder %s100, %s103
      %p109 = scmp.eq.s32.totalorder %s24, 0
      %p110 = por %p108, %p109
      %p111 = scmp.ne.s32.totalorder %s100, %s103
      %p112 = scmp.eq.s32.totalorder %s29, 1
      %p113 = por %p111, %p112
      %p114 = scmp.ne.s32.totalorder %s103, %s104
      %p115 = scmp.eq.s32.totalorder %s29, 0
      %p116 = por %p114, %p115
      %p117 = scmp.ne.s32.totalorder %s103, %s104
      %p118 = scmp.eq.s32.totalorder %s30, 1
      %p119 = por %p117, %p118
      %p121 = scmp.ne.s32.totalorder %s104, %s120
      %p122 = scmp.eq.s32.totalorder %s30, 0
      %p123 = por %p121, %p122
      %s125 = sadd.s32 %s124, 1
      %p128 = scmp.eq.s32.totalorder %s24, 1
      %p129 = scmp.ne.s32.totalorder %s124, %s126
      %p130 = scmp.eq.s32.totalorder %s24, 0
      %p131 = por %p129, %p130
      %p132 = scmp.ne.s32.totalorder %s124, %s126
      %p133 = scmp.eq.s32.totalorder %s29, 1
      %p134 = por %p132, %p133
      %p135 = scmp.ne.s32.totalorder %s126, %s127
      %p136 = scmp.eq.s32.totalorder %s29, 0
      %p137 = por %p135, %p136
      %p138 = scmp.ne.s32.totalorder %s126, %s127
      %p139 = scmp.eq.s32.totalorder %s30, 1
      %p140 = por %p138, %p139
      %p142 = scmp.ne.s32.totalorder %s127, %s141
      %p143 = scmp.eq.s32.totalorder %s30, 0
      %p144 = por %p142, %p143
      %s146 = sadd.s32 %s145, 1
      %p149 = scmp.eq.s32.totalorder %s24, 1
      %p150 = scmp.ne.s32.totalorder %s145, %s147
      %p151 = scmp.eq.s32.totalorder %s24, 0
      %p152 = por %p150, %p151
      %p153 = scmp.ne.s32.totalorder %s145, %s147
      %p154 = scmp.eq.s32.totalorder %s29, 1
      %p155 = por %p153, %p154
      %p156 = scmp.ne.s32.totalorder %s147, %s148
      %p157 = scmp.eq.s32.totalorder %s29, 0
      %p158 = por %p156, %p157
      %p159 = scmp.ne.s32.totalorder %s147, %s148
      %p160 = scmp.eq.s32.totalorder %s30, 1
      %p161 = por %p159, %p160
      %p163 = scmp.ne.s32.totalorder %s148, %s162
      %p164 = scmp.eq.s32.totalorder %s30, 0
      %p165 = por %p163, %p164
      %s167 = sadd.s32 %s166, 1
      %p170 = scmp.eq.s32.totalorder %s24, 1
      %p171 = scmp.ne.s32.totalorder %s166, %s168
      %p172 = scmp.eq.s32.totalorder %s24, 0
      %p173 = por %p171, %p172
      %p174 = scmp.ne.s32.totalorder %s166, %s168
      %p175 = scmp.eq.s32.totalorder %s29, 1
      %p176 = por %p174, %p175
      %p177 = scmp.ne.s32.totalorder %s168, %s169
      %p178 = scmp.eq.s32.totalorder %s29, 0
      %p179 = por %p177, %p178
      %p180 = scmp.ne.s32.totalorder %s168, %s169
      %p181 = scmp.eq.s32.totalorder %s30, 1
      %p182 = por %p180, %p181
      %p184 = scmp.ne.s32.totalorder %s169, %s183
      %p185 = scmp.eq.s32.totalorder %s30, 0
      %p186 = por %p184, %p185
      %s187 = ssub.s32 %s32, %s39
      %s188 = ssub.s32 %s31, %s43
      %s189 = sor.u32 %s187, %s188
      %p190 = scmp.eq.s32.totalorder %s189, 0
      %s192 = sadd.s32 %s191, 1
      %s193 = scalar_select %p190, %s191, %s192
      %p196 = pneg %p190
      %p197 = scmp.eq.s32.totalorder %s24, 1
      %p198 = por %p196, %p197
      %p199 = scmp.ne.s32.totalorder %s191, %s194
      %p200 = scmp.eq.s32.totalorder %s24, 0
      %p201 = por %p199, %p200
      %p202 = scmp.ne.s32.totalorder %s191, %s194
      %p203 = scmp.eq.s32.totalorder %s29, 1
      %p204 = por %p202, %p203
      %p205 = scmp.ne.s32.totalorder %s194, %s195
      %p206 = scmp.eq.s32.totalorder %s29, 0
      %p207 = por %p205, %p206
      %p208 = scmp.ne.s32.totalorder %s194, %s195
      %p209 = scmp.eq.s32.totalorder %s30, 1
      %p210 = por %p208, %p209
      %p212 = scmp.ne.s32.totalorder %s195, %s211
      %p213 = scmp.eq.s32.totalorder %s30, 0
      %p214 = por %p212, %p213
      %s215 = ssub.s32 %s31, %s43
      %p216 = scmp.eq.s32.totalorder %s215, 0
      %s218 = sadd.s32 %s217, 1
      %s219 = scalar_select %p216, %s217, %s218
      %p222 = pneg %p216
      %p223 = scmp.eq.s32.totalorder %s24, 1
      %p224 = por %p222, %p223
      %p225 = scmp.ne.s32.totalorder %s217, %s220
      %p226 = scmp.eq.s32.totalorder %s24, 0
      %p227 = por %p225, %p226
      %p228 = scmp.ne.s32.totalorder %s217, %s220
      %p229 = scmp.eq.s32.totalorder %s29, 1
      %p230 = por %p228, %p229
      %p231 = scmp.ne.s32.totalorder %s220, %s221
      %p232 = scmp.eq.s32.totalorder %s29, 0
      %p233 = por %p231, %p232
      %p234 = scmp.ne.s32.totalorder %s220, %s221
      %p235 = scmp.eq.s32.totalorder %s30, 1
      %p236 = por %p234, %p235
      %p238 = scmp.ne.s32.totalorder %s221, %s237
      %p239 = scmp.eq.s32.totalorder %s30, 0
      %p240 = por %p238, %p239
      %s241 = ssub.s32 %s31, %s43
      %p242 = scmp.eq.s32.totalorder %s241, 0
      %s244 = sadd.s32 %s243, 1
      %s245 = scalar_select %p242, %s243, %s244
      %p248 = pneg %p242
      %p249 = scmp.eq.s32.totalorder %s24, 1
      %p250 = por %p248, %p249
      %p251 = scmp.ne.s32.totalorder %s243, %s246
      %p252 = scmp.eq.s32.totalorder %s24, 0
      %p253 = por %p251, %p252
      %p254 = scmp.ne.s32.totalorder %s243, %s246
      %p255 = scmp.eq.s32.totalorder %s29, 1
      %p256 = por %p254, %p255
      %p257 = scmp.ne.s32.totalorder %s246, %s247
      %p258 = scmp.eq.s32.totalorder %s29, 0
      %p259 = por %p257, %p258
      %p260 = scmp.ne.s32.totalorder %s246, %s247
      %p261 = scmp.eq.s32.totalorder %s30, 1
      %p262 = por %p260, %p261
      %p264 = scmp.ne.s32.totalorder %s247, %s263
      %p265 = scmp.eq.s32.totalorder %s30, 0
      %p266 = por %p264, %p265
      %p267 = scmp.le.s32.totalorder 1, %s24
      %p268 = scmp.lt.s32.totalorder %s24, 3
      %p269 = pnand %p267, %p268
      %p270 = pneg %p269
      // Predicated region
      $region9: #{tpu_custom_call.1} parent=5 // pred_check
        _
      $region10: #{tpu_custom_call.1} parent=5 // pred_check_branch
        %272 = sbr.rel (%p269) target = $region12
      $region11: #{tpu_custom_call.1} parent=5 // pred_region
        %s273 = ssub.s32 %s24, 1
        // Predicated region
        $region13: #{tpu_custom_call.1} parent=11 // pred_check
          %p274 = pneg %p90
        $region14: #{tpu_custom_call.1} parent=11 // pred_check_branch
          %276 = sbr.rel (%p274) target = $region16
        $region15: #{tpu_custom_call.1} parent=11 // pred_region
          %s278 = ssub.s32 128, 128
          %279 = vsyncadd [#allocation9], %s278
          %s280 = smul.addr %s33, 128
          %s281 = scalar_lea.hbm %s1, %s280
          %s283 = sshll.u32 [#allocation8], 4
          %s284 = int_to_ptr.vmem [resolvable:$true] %s283
          %286 = dma.hbm_to_vmem [thread:$0]  %s281, 128, %s284, [#allocation9]
        $region16: #{tpu_custom_call.1} parent=11 // pred_fallthru
          _
        // Predicated region
        $region17: #{tpu_custom_call.1} parent=11 // pred_check
          %p287 = pneg %p116
        $region18: #{tpu_custom_call.1} parent=11 // pred_check_branch
          %289 = sbr.rel (%p287) target = $region20
        $region19: #{tpu_custom_call.1} parent=11 // pred_region
          %s291 = ssub.s32 128, 128
          %292 = vsyncadd [#allocation9], %s291
          %s293 = smul.addr %s33, 128
          %s294 = scalar_lea.hbm %s2, %s293
          %s296 = sshll.u32 [#allocation10], 4
          %s297 = int_to_ptr.vmem [resolvable:$true] %s296
          %299 = dma.hbm_to_vmem [thread:$0]  %s294, 128, %s297, [#allocation9]
        $region20: #{tpu_custom_call.1} parent=11 // pred_fallthru
          _
        // Predicated region
        $region21: #{tpu_custom_call.1} parent=11 // pred_check
          %p300 = pneg %p137
        $region22: #{tpu_custom_call.1} parent=11 // pred_check_branch
          %302 = sbr.rel (%p300) target = $region24
        $region23: #{tpu_custom_call.1} parent=11 // pred_region
          %s304 = ssub.s32 256, 256
          %305 = vsyncadd [#allocation12], %s304
          %s306 = sshll.u32 [#allocation11], 4
          %s307 = int_to_ptr.vmem [resolvable:$true] %s306
          %312 = dma.hbm_to_vmem [thread:$0]  %s3, 256, %s307, [#allocation12], 64, 64, 4
        $region24: #{tpu_custom_call.1} parent=11 // pred_fallthru
          _
        // Predicated region
        $region25: #{tpu_custom_call.1} parent=11 // pred_check
          %p313 = pneg %p158
        $region26: #{tpu_custom_call.1} parent=11 // pred_check_branch
          %315 = sbr.rel (%p313) target = $region28
        $region27: #{tpu_custom_call.1} parent=11 // pred_region
          %s317 = ssub.s32 256, 256
          %318 = vsyncadd [#allocation12], %s317
          %s319 = sshll.u32 [#allocation13], 4
          %s320 = int_to_ptr.vmem [resolvable:$true] %s319
          %325 = dma.hbm_to_vmem [thread:$0]  %s4, 256, %s320, [#allocation12], 64, 64, 4
        $region28: #{tpu_custom_call.1} parent=11 // pred_fallthru
          _
        // Predicated region
        $region29: #{tpu_custom_call.1} parent=11 // pred_check
          %p326 = pneg %p179
        $region30: #{tpu_custom_call.1} parent=11 // pred_check_branch
          %328 = sbr.rel (%p326) target = $region32
        $region31: #{tpu_custom_call.1} parent=11 // pred_region
          _
        $region32: #{tpu_custom_call.1} parent=11 // pred_fallthru
          _
      $region12: #{tpu_custom_call.1} parent=5 // pred_fallthru
        _
      %p329 = scmp.lt.s32.totalorder %s24, 2
      // Predicated region
      $region33: #{tpu_custom_call.1} parent=5 // pred_check
        %p330 = pneg %p329
      $region34: #{tpu_custom_call.1} parent=5 // pred_check_branch
        %332 = sbr.rel (%p330) target = $region36
      $region35: #{tpu_custom_call.1} parent=5 // pred_region
        // Predicated region
        $region37: #{tpu_custom_call.1} parent=35 // pred_check
          %p333 = pneg %p58
        $region38: #{tpu_custom_call.1} parent=35 // pred_check_branch
          %335 = sbr.rel (%p333) target = $region40
        $region39: #{tpu_custom_call.1} parent=35 // pred_region
          %s336 = sand.u32 %s48, 1
          %s337 = scalar_lea.sflag [#allocation6], %s336
          %s338 = sand.u32 %s48, 1
          %s339 = smul.addr %s338, 16
          %s340 = scalar_lea.vmem [#allocation5], %s339
          %s341 = smul.u32 4, %s32
          %s343 = ssub.s32 256, 256
          %344 = vsyncadd %s337, %s343
          %s345 = sadd.s32 %s31, %s341
          %s346 = smul.addr %s345, 64
          %s347 = scalar_lea.hbm %s0, %s346
          %s348 = sshll.u32 %s340, 4
          %s349 = int_to_ptr.vmem [resolvable:$true] %s348
          %354 = dma.hbm_to_vmem [thread:$0]  %s347, 256, %s349, %s337, 64, 64, 4
        $region40: #{tpu_custom_call.1} parent=35 // pred_fallthru
          _
      $region36: #{tpu_custom_call.1} parent=5 // pred_fallthru
        _
      %p355 = scmp.le.s32.totalorder 1, %s24
      %p356 = scmp.lt.s32.totalorder %s24, 3
      %p357 = pnand %p355, %p356
      %p358 = pneg %p357
      // Predicated region
      $region41: #{tpu_custom_call.1} parent=5 // pred_check
        _
      $region42: #{tpu_custom_call.1} parent=5 // pred_check_branch
        %360 = sbr.rel (%p357) target = $region44
      $region43: #{tpu_custom_call.1} parent=5 // pred_region
        %s361 = ssub.s32 %s24, 1
        %s362 = sand.u32 %s51, 1
        %s363 = scalar_lea.sflag [#allocation6], %s362
        %s364 = sand.u32 %s51, 1
        %s365 = smul.addr %s364, 16
        %s366 = scalar_lea.vmem [#allocation5], %s365
        // Predicated region
        $region45: #{tpu_custom_call.1} parent=43 // pred_check
          %p367 = pneg %p64
        $region46: #{tpu_custom_call.1} parent=43 // pred_check_branch
          %369 = sbr.rel (%p367) target = $region48
        $region47: #{tpu_custom_call.1} parent=43 // pred_region
          %370 = dma.done %s363, 256
        $region48: #{tpu_custom_call.1} parent=43 // pred_fallthru
          _
        // Predicated region
        $region49: #{tpu_custom_call.1} parent=43 // pred_check
          %p371 = pneg %p90
        $region50: #{tpu_custom_call.1} parent=43 // pred_check_branch
          %373 = sbr.rel (%p371) target = $region52
        $region51: #{tpu_custom_call.1} parent=43 // pred_region
          %374 = dma.done [#allocation9], 128
        $region52: #{tpu_custom_call.1} parent=43 // pred_fallthru
          _
        // Predicated region
        $region53: #{tpu_custom_call.1} parent=43 // pred_check
          %p375 = pneg %p116
        $region54: #{tpu_custom_call.1} parent=43 // pred_check_branch
          %377 = sbr.rel (%p375) target = $region56
        $region55: #{tpu_custom_call.1} parent=43 // pred_region
          %378 = dma.done [#allocation9], 128
        $region56: #{tpu_custom_call.1} parent=43 // pred_fallthru
          _
        // Predicated region
        $region57: #{tpu_custom_call.1} parent=43 // pred_check
          %p379 = pneg %p137
        $region58: #{tpu_custom_call.1} parent=43 // pred_check_branch
          %381 = sbr.rel (%p379) target = $region60
        $region59: #{tpu_custom_call.1} parent=43 // pred_region
          %382 = dma.done [#allocation12], 256
        $region60: #{tpu_custom_call.1} parent=43 // pred_fallthru
          _
        // Predicated region
        $region61: #{tpu_custom_call.1} parent=43 // pred_check
          %p383 = pneg %p158
        $region62: #{tpu_custom_call.1} parent=43 // pred_check_branch
          %385 = sbr.rel (%p383) target = $region64
        $region63: #{tpu_custom_call.1} parent=43 // pred_region
          %386 = dma.done [#allocation12], 256
        $region64: #{tpu_custom_call.1} parent=43 // pred_fallthru
          _
        %s387 = sand.u32 %s51, 1
        %s388 = scalar_lea.sflag [#allocation6], %s387
        %s389 = sand.u32 %s51, 1
        %s390 = smul.addr %s389, 16
        %s391 = scalar_lea.vmem [#allocation5], %s390
        %p392 = pneg %p64
        %p393 = pneg %p61
        %p394 = pneg %p90
        %p395 = pneg %p87
        %p396 = pneg %p116
        %p397 = pneg %p113
        %p398 = pneg %p137
        %p399 = pneg %p134
        %p400 = pneg %p158
        %p401 = pneg %p155
        %p402 = pneg %p179
        %p403 = pneg %p176
        %p404 = pneg %p207
        %p405 = pneg %p204
        %s406 = sand.u32 %s194, 1
        %s407 = scalar_lea.sflag [#allocation7], %s406
        %s408 = sand.u32 %s194, 1
        %s409 = smul.addr %s408, 32
        %s410 = scalar_lea.vmem [#allocation14], %s409
        %p411 = pneg %p233
        %p412 = pneg %p230
        %p413 = pneg %p259
        %p414 = pneg %p256
        %s415 = smul.u32 4, %s34
        %s416 = smul.u32 4, %s34
        %p418 = scmp.eq.s32.totalorder %s34, 0
        // Predicated region
        $region65: #{tpu_custom_call.1} parent=43 // pred_check
          %p419 = pneg %p418
        $region66: #{tpu_custom_call.1} parent=43 // pred_check_branch
          %421 = sbr.rel (%p419) target = $region68
        $region67: #{tpu_custom_call.1} parent=43 // pred_region
          %v422 = vld [vmem:[#allocation8] sm:$0xff]
          %vm423 = vcmask 261120
          %424 = vst.msk [vmem:[#allocation3] sm:$0xff] %vm423, %v422
          %v425 = vld [vmem:[#allocation10] sm:$0xff]
          %426 = vst.msk [vmem:[#allocation4] sm:$0xff] %vm423, %v425
        $region68: #{tpu_custom_call.1} parent=43 // pred_fallthru
          _
        %v427 = vld [vmem:[%s366] sm:$0xf]
        %v428 = vld [vmem:[%s366 + $0x4] sm:$0xf]
        %v429 = vld [vmem:[%s366 + $0x8] sm:$0xf]
        %v430 = vld [vmem:[%s366 + $0xc] sm:$0xf]
        %v431 = vld [vmem:[#allocation11] sm:$0xf]
        %v432 = vld [vmem:[#allocation11 + $0x4] sm:$0xf]
        %v433 = vld [vmem:[#allocation11 + $0x8] sm:$0xf]
        %v434 = vld [vmem:[#allocation11 + $0xc] sm:$0xf]
        %v435 = vld [vmem:[%s5] sm:$0x1]
        %v437 = vlaneseq
        %v438 = vshrl.u32 %v437, 7
        %v439 = vsub.s32 0, %v438
        %v440 = vrot.slane %v435, %v439
        %v446 = vunpack.c.l.b16 %v427
        %v447 = vunpack.c.l.b16 %v428
        %v448 = vunpack.c.l.b16 %v429
        %v449 = vunpack.c.l.b16 %v430
        %v450 = vpack.c.b16 %v447, %v446
        %v451 = vpack.c.b16 %v449, %v448
        %v456 = vunpack.c.l.b16 %v431
        %v457 = vunpack.c.l.b16 %v432
        %v458 = vunpack.c.l.b16 %v433
        %v459 = vunpack.c.l.b16 %v434
        %v460 = vpack.c.b16 %v457, %v456
        %v461 = vpack.c.b16 %v459, %v458
        %vm464 = vcmask 261120
        %v466 = vsel %vm464, %v450, 0
        %v469 = vsel %vm464, %v451, 0
        %471 = vmatprep.subr.bf16.mxu0 0
        %472 = vmatpush1.bf16.msra.mxu0 %v460
        %473 = vmatprep.subr.bf16.mxu0 0
        %474 = vmatpush1.bf16.msra.mxu0 %v461
        %475 = vmatprep.subr.bf16.mxu0 0
        %476 = vmatpush1.bf16.msra.mxu0 0
        %477 = vmatprep.subr.bf16.mxu0 0
        %478 = vmatpush1.bf16.msra.mxu0 0
        %479 = vmatprep.subr.bf16.mxu0 0
        %480 = vmatpush1.bf16.msra.mxu0 0
        %481 = vmatprep.subr.bf16.mxu0 0
        %482 = vmatpush1.bf16.msra.mxu0 0
        %483 = vmatprep.subr.bf16.mxu0 0
        %484 = vmatpush1.bf16.msra.mxu0 0
        %485 = vmatprep.subr.bf16.mxu0 0
        %486 = vmatpush1.bf16.msra.mxu0 0
        %487 = vmatprep.subr.bf16.mxu0 0
        %488 = vmatpush1.bf16.msra.mxu0 0
        %489 = vmatprep.subr.bf16.mxu0 0
        %490 = vmatpush1.bf16.msra.mxu0 0
        %491 = vmatprep.subr.bf16.mxu0 0
        %492 = vmatpush1.bf16.msra.mxu0 0
        %493 = vmatprep.subr.bf16.mxu0 0
        %494 = vmatpush1.bf16.msra.mxu0 0
        %495 = vmatprep.subr.bf16.mxu0 0
        %496 = vmatpush1.bf16.msra.mxu0 0
        %497 = vmatprep.subr.bf16.mxu0 0
        %498 = vmatpush1.bf16.msra.mxu0 0
        %499 = vmatprep.subr.bf16.mxu0 0
        %500 = vmatpush1.bf16.msra.mxu0 0
        %501 = vmatprep.subr.bf16.mxu0 0
        %502 = vmatpush1.bf16.msra.mxu0 0
        %503 = vmatprep.mubr.bf16.mxu0 0
        %504 = vmatmul.mubr.bf16.gmra.mrb[0].mxu0 %v466
        %v505 = vpop.f32.mrb[0].mxu0
        %v506 = vadd.f32 %v440, %v505
        %v507 = vpop.f32.mrb[0].mxu0
        %v508 = vpop.f32.mrb[0].mxu0
        %v509 = vadd.f32 %v440, %v508
        %v510 = vpop.f32.mrb[0].mxu0
        %511 = vmatprep.mubr.bf16.mxu0 0
        %512 = vmatmul.mubr.bf16.gmra.mrb[0].mxu0 %v469
        %v513 = vpop.f32.mrb[0].mxu0
        %v514 = vadd.f32 %v440, %v513
        %v515 = vpop.f32.mrb[0].mxu0
        %v516 = vpop.f32.mrb[0].mxu0
        %v517 = vadd.f32 %v440, %v516
        %v518 = vpop.f32.mrb[0].mxu0
        %519 = vdwg.mxu0
        %520 = vst [vmem:[#allocation2] sm:$0xff] %v506
        %521 = vst [vmem:[#allocation2 + $0x8] sm:$0xff] %v509
        %522 = vst [vmem:[#allocation2 + $0x10] sm:$0xff] %v514
        %523 = vst [vmem:[#allocation2 + $0x18] sm:$0xff] %v517
        %v524 = vld [vmem:[#allocation13] sm:$0xf]
        %v525 = vld [vmem:[#allocation13 + $0x4] sm:$0xf]
        %v526 = vld [vmem:[#allocation13 + $0x8] sm:$0xf]
        %v527 = vld [vmem:[#allocation13 + $0xc] sm:$0xf]
        %v528 = vld [vmem:[#allocation3] sm:$0xff]
        %v529 = vld [vmem:[#allocation4] sm:$0xff]
        %v530 = vld [vmem:[#allocation2] sm:$0xff]
        %v531 = vpack.c.bf16 %v528, %v528
        %v536 = vunpack.c.l.b16 %v524
        %v537 = vunpack.c.l.b16 %v525
        %v538 = vunpack.c.l.b16 %v526
        %v539 = vunpack.c.l.b16 %v527
        %v540 = vpack.c.b16 %v537, %v536
        %v541 = vpack.c.b16 %v539, %v538
        %v545 = vsel %vm464, %v531, 0
        %547 = vmatprep.subr.bf16.mxu0 0
        %548 = vmatpush1.bf16.msra.mxu0 %v540
        %549 = vmatprep.subr.bf16.mxu0 0
        %550 = vmatpush1.bf16.msra.mxu0 %v541
        %551 = vmatprep.subr.bf16.mxu0 0
        %552 = vmatpush1.bf16.msra.mxu0 0
        %553 = vmatprep.subr.bf16.mxu0 0
        %554 = vmatpush1.bf16.msra.mxu0 0
        %555 = vmatprep.subr.bf16.mxu0 0
        %556 = vmatpush1.bf16.msra.mxu0 0
        %557 = vmatprep.subr.bf16.mxu0 0
        %558 = vmatpush1.bf16.msra.mxu0 0
        %559 = vmatprep.subr.bf16.mxu0 0
        %560 = vmatpush1.bf16.msra.mxu0 0
        %561 = vmatprep.subr.bf16.mxu0 0
        %562 = vmatpush1.bf16.msra.mxu0 0
        %563 = vmatprep.subr.bf16.mxu0 0
        %564 = vmatpush1.bf16.msra.mxu0 0
        %565 = vmatprep.subr.bf16.mxu0 0
        %566 = vmatpush1.bf16.msra.mxu0 0
        %567 = vmatprep.subr.bf16.mxu0 0
        %568 = vmatpush1.bf16.msra.mxu0 0
        %569 = vmatprep.subr.bf16.mxu0 0
        %570 = vmatpush1.bf16.msra.mxu0 0
        %571 = vmatprep.subr.bf16.mxu0 0
        %572 = vmatpush1.bf16.msra.mxu0 0
        %573 = vmatprep.subr.bf16.mxu0 0
        %574 = vmatpush1.bf16.msra.mxu0 0
        %575 = vmatprep.subr.bf16.mxu0 0
        %576 = vmatpush1.bf16.msra.mxu0 0
        %577 = vmatprep.subr.bf16.mxu0 0
        %578 = vmatpush1.bf16.msra.mxu0 0
        %579 = vmatprep.mubr.bf16.mxu0 0
        %580 = vmatmul.mubr.bf16.gmra.mrb[0].mxu0 %v545
        %v581 = vpop.f32.mrb[0].mxu0
        %v582 = vadd.f32 0.0, %v581
        %v583 = vpop.f32.mrb[0].mxu0
        %v584 = vpop.f32.mrb[0].mxu0
        %v585 = vpop.f32.mrb[0].mxu0
        %586 = vdwg.mxu0
        %v587 = vadd.f32 %v530, %v582
        %v588 = vxor.u32 %v587, 2147483648
        %v589 = vmul.f32 %v588, 1.442695
        %v590 = vpow.pop %v589
        %v591 = vadd.f32 %v590, 1.0
        %v592 = vrcp.pop %v591
        %v593 = vmul.f32 1.0, %v592
        %v594 = vtanh.pop %v587
        %596 = vrot.lane.b32.xlu0 %v529, 32
        %v597 = vpop.permute.xlu0 %596
        %v599 = vmul.f32 %v593, %v597
        %601 = vrot.lane.b32.xlu0 %v594, 32
        %v602 = vpop.permute.xlu0 %601
        %v604 = vmul.f32 %v593, %v602
        %606 = vrot.lane.b32.xlu0 %v604, 32
        %v607 = vpop.permute.xlu0 %606
        %v609 = vadd.f32 %v599, %v607
        %v610 = vtanh.pop %v609
        %612 = vrot.lane.b32.xlu0 %v610, 32
        %v613 = vpop.permute.xlu0 %612
        %v615 = vmul.f32 %v593, %v613
        %617 = vrot.lane.b32.xlu0 %v615, 64
        %v618 = vpop.permute.xlu0 %617
        %620 = vst.msk [vmem:[%s410] sm:$0xff] %vm464, %v618
        %s621 = scalar_lea.vmem [#allocation2], 8
        %v622 = vld [vmem:[%s621] sm:$0xff]
        %v623 = vpack.c.bf16 %v615, %v615
        %625 = vrot.lane.b32.xlu0 %v623, 64
        %v626 = vpop.permute.xlu0 %625
        %v628 = vsel %vm464, %v626, 0
        %630 = vmatprep.subr.bf16.mxu0 0
        %631 = vmatpush1.bf16.msra.mxu0 %v540
        %632 = vmatprep.subr.bf16.mxu0 0
        %633 = vmatpush1.bf16.msra.mxu0 %v541
        %634 = vmatprep.subr.bf16.mxu0 0
        %635 = vmatpush1.bf16.msra.mxu0 0
        %636 = vmatprep.subr.bf16.mxu0 0
        %637 = vmatpush1.bf16.msra.mxu0 0
        %638 = vmatprep.subr.bf16.mxu0 0
        %639 = vmatpush1.bf16.msra.mxu0 0
        %640 = vmatprep.subr.bf16.mxu0 0
        %641 = vmatpush1.bf16.msra.mxu0 0
        %642 = vmatprep.subr.bf16.mxu0 0
        %643 = vmatpush1.bf16.msra.mxu0 0
        %644 = vmatprep.subr.bf16.mxu0 0
        %645 = vmatpush1.bf16.msra.mxu0 0
        %646 = vmatprep.subr.bf16.mxu0 0
        %647 = vmatpush1.bf16.msra.mxu0 0
        %648 = vmatprep.subr.bf16.mxu0 0
        %649 = vmatpush1.bf16.msra.mxu0 0
        %650 = vmatprep.subr.bf16.mxu0 0
        %651 = vmatpush1.bf16.msra.mxu0 0
        %652 = vmatprep.subr.bf16.mxu0 0
        %653 = vmatpush1.bf16.msra.mxu0 0
        %654 = vmatprep.subr.bf16.mxu0 0
        %655 = vmatpush1.bf16.msra.mxu0 0
        %656 = vmatprep.subr.bf16.mxu0 0
        %657 = vmatpush1.bf16.msra.mxu0 0
        %658 = vmatprep.subr.bf16.mxu0 0
        %659 = vmatpush1.bf16.msra.mxu0 0
        %660 = vmatprep.subr.bf16.mxu0 0
        %661 = vmatpush1.bf16.msra.mxu0 0
        %662 = vmatprep.mubr.bf16.mxu0 0
        %663 = vmatmul.mubr.bf16.gmra.mrb[0].mxu0 %v628
        %v664 = vpop.f32.mrb[0].mxu0
        %v665 = vadd.f32 0.0, %v664
        %v666 = vpop.f32.mrb[0].mxu0
        %v667 = vpop.f32.mrb[0].mxu0
        %v668 = vpop.f32.mrb[0].mxu0
        %669 = vdwg.mxu0
        %v670 = vadd.f32 %v622, %v665
        %v671 = vxor.u32 %v670, 2147483648
        %v672 = vmul.f32 %v671, 1.442695
        %v673 = vpow.pop %v672
        %v674 = vadd.f32 %v673, 1.0
        %v675 = vrcp.pop %v674
        %v676 = vmul.f32 1.0, %v675
        %v677 = vtanh.pop %v670
        %v678 = vmul.f32 %v676, %v609
        %680 = vrot.lane.b32.xlu0 %v677, 32
        %v681 = vpop.permute.xlu0 %680
        %v683 = vmul.f32 %v676, %v681
        %685 = vrot.lane.b32.xlu0 %v683, 32
        %v686 = vpop.permute.xlu0 %685
        %v688 = vadd.f32 %v678, %v686
        %v689 = vtanh.pop %v688
        %691 = vrot.lane.b32.xlu0 %v689, 32
        %v692 = vpop.permute.xlu0 %691
        %v694 = vmul.f32 %v676, %v692
        %696 = vrot.lane.b32.xlu0 %v694, 64
        %v697 = vpop.permute.xlu0 %696
        %s699 = scalar_lea.vmem %s410, 8 [#allocation14]
        %700 = vst.msk [vmem:[%s699] sm:$0xff] %vm464, %v697
        %s701 = scalar_lea.vmem [#allocation2], 16
        %v702 = vld [vmem:[%s701] sm:$0xff]
        %v703 = vpack.c.bf16 %v694, %v694
        %705 = vrot.lane.b32.xlu0 %v703, 64
        %v706 = vpop.permute.xlu0 %705
        %v708 = vsel %vm464, %v706, 0
        %710 = vmatprep.subr.bf16.mxu0 0
        %711 = vmatpush1.bf16.msra.mxu0 %v540
        %712 = vmatprep.subr.bf16.mxu0 0
        %713 = vmatpush1.bf16.msra.mxu0 %v541
        %714 = vmatprep.subr.bf16.mxu0 0
        %715 = vmatpush1.bf16.msra.mxu0 0
        %716 = vmatprep.subr.bf16.mxu0 0
        %717 = vmatpush1.bf16.msra.mxu0 0
        %718 = vmatprep.subr.bf16.mxu0 0
        %719 = vmatpush1.bf16.msra.mxu0 0
        %720 = vmatprep.subr.bf16.mxu0 0
        %721 = vmatpush1.bf16.msra.mxu0 0
        %722 = vmatprep.subr.bf16.mxu0 0
        %723 = vmatpush1.bf16.msra.mxu0 0
        %724 = vmatprep.subr.bf16.mxu0 0
        %725 = vmatpush1.bf16.msra.mxu0 0
        %726 = vmatprep.subr.bf16.mxu0 0
        %727 = vmatpush1.bf16.msra.mxu0 0
        %728 = vmatprep.subr.bf16.mxu0 0
        %729 = vmatpush1.bf16.msra.mxu0 0
        %730 = vmatprep.subr.bf16.mxu0 0
        %731 = vmatpush1.bf16.msra.mxu0 0
        %732 = vmatprep.subr.bf16.mxu0 0
        %733 = vmatpush1.bf16.msra.mxu0 0
        %734 = vmatprep.subr.bf16.mxu0 0
        %735 = vmatpush1.bf16.msra.mxu0 0
        %736 = vmatprep.subr.bf16.mxu0 0
        %737 = vmatpush1.bf16.msra.mxu0 0
        %738 = vmatprep.subr.bf16.mxu0 0
        %739 = vmatpush1.bf16.msra.mxu0 0
        %740 = vmatprep.subr.bf16.mxu0 0
        %741 = vmatpush1.bf16.msra.mxu0 0
        %742 = vmatprep.mubr.bf16.mxu0 0
        %743 = vmatmul.mubr.bf16.gmra.mrb[0].mxu0 %v708
        %v744 = vpop.f32.mrb[0].mxu0
        %v745 = vadd.f32 0.0, %v744
        %v746 = vpop.f32.mrb[0].mxu0
        %v747 = vpop.f32.mrb[0].mxu0
        %v748 = vpop.f32.mrb[0].mxu0
        %749 = vdwg.mxu0
        %v750 = vadd.f32 %v702, %v745
        %v751 = vxor.u32 %v750, 2147483648
        %v752 = vmul.f32 %v751, 1.442695
        %v753 = vpow.pop %v752
        %v754 = vadd.f32 %v753, 1.0
        %v755 = vrcp.pop %v754
        %v756 = vmul.f32 1.0, %v755
        %v757 = vtanh.pop %v750
        %v758 = vmul.f32 %v756, %v688
        %760 = vrot.lane.b32.xlu0 %v757, 32
        %v761 = vpop.permute.xlu0 %760
        %v763 = vmul.f32 %v756, %v761
        %765 = vrot.lane.b32.xlu0 %v763, 32
        %v766 = vpop.permute.xlu0 %765
        %v768 = vadd.f32 %v758, %v766
        %v769 = vtanh.pop %v768
        %771 = vrot.lane.b32.xlu0 %v769, 32
        %v772 = vpop.permute.xlu0 %771
        %v774 = vmul.f32 %v756, %v772
        %776 = vrot.lane.b32.xlu0 %v774, 64
        %v777 = vpop.permute.xlu0 %776
        %s779 = scalar_lea.vmem %s410, 16 [#allocation14]
        %780 = vst.msk [vmem:[%s779] sm:$0xff] %vm464, %v777
        %s781 = scalar_lea.vmem [#allocation2], 24
        %v782 = vld [vmem:[%s781] sm:$0xff]
        %v783 = vpack.c.bf16 %v774, %v774
        %785 = vrot.lane.b32.xlu0 %v783, 64
        %v786 = vpop.permute.xlu0 %785
        %v788 = vsel %vm464, %v786, 0
        %790 = vmatprep.subr.bf16.mxu0 0
        %791 = vmatpush1.bf16.msra.mxu0 %v540
        %792 = vmatprep.subr.bf16.mxu0 0
        %793 = vmatpush1.bf16.msra.mxu0 %v541
        %794 = vmatprep.subr.bf16.mxu0 0
        %795 = vmatpush1.bf16.msra.mxu0 0
        %796 = vmatprep.subr.bf16.mxu0 0
        %797 = vmatpush1.bf16.msra.mxu0 0
        %798 = vmatprep.subr.bf16.mxu0 0
        %799 = vmatpush1.bf16.msra.mxu0 0
        %800 = vmatprep.subr.bf16.mxu0 0
        %801 = vmatpush1.bf16.msra.mxu0 0
        %802 = vmatprep.subr.bf16.mxu0 0
        %803 = vmatpush1.bf16.msra.mxu0 0
        %804 = vmatprep.subr.bf16.mxu0 0
        %805 = vmatpush1.bf16.msra.mxu0 0
        %806 = vmatprep.subr.bf16.mxu0 0
        %807 = vmatpush1.bf16.msra.mxu0 0
        %808 = vmatprep.subr.bf16.mxu0 0
        %809 = vmatpush1.bf16.msra.mxu0 0
        %810 = vmatprep.subr.bf16.mxu0 0
        %811 = vmatpush1.bf16.msra.mxu0 0
        %812 = vmatprep.subr.bf16.mxu0 0
        %813 = vmatpush1.bf16.msra.mxu0 0
        %814 = vmatprep.subr.bf16.mxu0 0
        %815 = vmatpush1.bf16.msra.mxu0 0
        %816 = vmatprep.subr.bf16.mxu0 0
        %817 = vmatpush1.bf16.msra.mxu0 0
        %818 = vmatprep.subr.bf16.mxu0 0
        %819 = vmatpush1.bf16.msra.mxu0 0
        %820 = vmatprep.subr.bf16.mxu0 0
        %821 = vmatpush1.bf16.msra.mxu0 0
        %822 = vmatprep.mubr.bf16.mxu0 0
        %823 = vmatmul.mubr.bf16.gmra.mrb[0].mxu0 %v788
        %v824 = vpop.f32.mrb[0].mxu0
        %v825 = vadd.f32 0.0, %v824
        %v826 = vpop.f32.mrb[0].mxu0
        %v827 = vpop.f32.mrb[0].mxu0
        %v828 = vpop.f32.mrb[0].mxu0
        %829 = vdwg.mxu0
        %v830 = vadd.f32 %v782, %v825
        %v831 = vxor.u32 %v830, 2147483648
        %v832 = vmul.f32 %v831, 1.442695
        %v833 = vpow.pop %v832
        %v834 = vadd.f32 %v833, 1.0
        %v835 = vrcp.pop %v834
        %v836 = vmul.f32 1.0, %v835
        %v837 = vtanh.pop %v830
        %v838 = vmul.f32 %v836, %v768
        %840 = vrot.lane.b32.xlu0 %v837, 32
        %v841 = vpop.permute.xlu0 %840
        %v843 = vmul.f32 %v836, %v841
        %845 = vrot.lane.b32.xlu0 %v843, 32
        %v846 = vpop.permute.xlu0 %845
        %v848 = vadd.f32 %v838, %v846
        %v849 = vtanh.pop %v848
        %851 = vrot.lane.b32.xlu0 %v849, 32
        %v852 = vpop.permute.xlu0 %851
        %v854 = vmul.f32 %v836, %v852
        %856 = vrot.lane.b32.xlu0 %v854, 64
        %v857 = vpop.permute.xlu0 %856
        %s859 = scalar_lea.vmem %s410, 24 [#allocation14]
        %860 = vst.msk [vmem:[%s859] sm:$0xff] %vm464, %v857
        %861 = vst.msk [vmem:[#allocation3] sm:$0xff] %vm464, %v857
        %863 = vrot.lane.b32.xlu0 %v848, 96
        %v864 = vpop.permute.xlu0 %863
        %866 = vst.msk [vmem:[#allocation4] sm:$0xff] %vm464, %v864
        %867 = vst.msk [vmem:[#allocation15] sm:$0xff] %vm464, %v857
        %868 = vst.msk [vmem:[#allocation17] sm:$0xff] %vm464, %v864
        %s869 = sand.u32 %s194, 1
        %s870 = scalar_lea.sflag [#allocation7], %s869
        %s871 = sand.u32 %s194, 1
        %s872 = smul.addr %s871, 32
        %s873 = scalar_lea.vmem [#allocation14], %s872
        // Predicated region
        $region69: #{tpu_custom_call.1} parent=43 // pred_check
          %p874 = pneg %p204
        $region70: #{tpu_custom_call.1} parent=43 // pred_check_branch
          %876 = sbr.rel (%p874) target = $region72
        $region71: #{tpu_custom_call.1} parent=43 // pred_region
          %s877 = smul.u32 4, %s34
          %s879 = ssub.s32 512, 512
          %880 = vsyncadd %s870, %s879
          %s881 = sadd.s32 %s33, %s877
          %s882 = smul.addr %s881, 128
          %s883 = scalar_lea.hbm %s6, %s882
          %s884 = sshll.u32 %s873, 4
          %s885 = int_to_ptr.vmem [resolvable:$true] %s884
          %890 = dma.vmem_to_hbm [thread:$0]  %s885, 512, %s883, %s870, 128, 128, 8
        $region72: #{tpu_custom_call.1} parent=43 // pred_fallthru
          _
        // Predicated region
        $region73: #{tpu_custom_call.1} parent=43 // pred_check
          %p891 = pneg %p230
        $region74: #{tpu_custom_call.1} parent=43 // pred_check_branch
          %893 = sbr.rel (%p891) target = $region76
        $region75: #{tpu_custom_call.1} parent=43 // pred_region
          %s895 = ssub.s32 128, 128
          %896 = vsyncadd [#allocation16], %s895
          %s897 = smul.addr %s33, 128
          %s898 = scalar_lea.hbm %s7, %s897
          %s900 = sshll.u32 [#allocation15], 4
          %s901 = int_to_ptr.vmem [resolvable:$true] %s900
          %903 = dma.vmem_to_hbm [thread:$0]  %s901, 128, %s898, [#allocation16]
        $region76: #{tpu_custom_call.1} parent=43 // pred_fallthru
          _
        // Predicated region
        $region77: #{tpu_custom_call.1} parent=43 // pred_check
          %p904 = pneg %p256
        $region78: #{tpu_custom_call.1} parent=43 // pred_check_branch
          %906 = sbr.rel (%p904) target = $region80
        $region79: #{tpu_custom_call.1} parent=43 // pred_region
          %s908 = ssub.s32 128, 128
          %909 = vsyncadd [#allocation16], %s908
          %s910 = smul.addr %s33, 128
          %s911 = scalar_lea.hbm %s8, %s910
          %s913 = sshll.u32 [#allocation17], 4
          %s914 = int_to_ptr.vmem [resolvable:$true] %s913
          %916 = dma.vmem_to_hbm [thread:$0]  %s914, 128, %s911, [#allocation16]
        $region80: #{tpu_custom_call.1} parent=43 // pred_fallthru
          _
        // Predicated region
        $region81: #{tpu_custom_call.1} parent=43 // pred_check
          %p917 = pneg %p230
        $region82: #{tpu_custom_call.1} parent=43 // pred_check_branch
          %919 = sbr.rel (%p917) target = $region84
        $region83: #{tpu_custom_call.1} parent=43 // pred_region
          %920 = dma.done [#allocation16], 128
        $region84: #{tpu_custom_call.1} parent=43 // pred_fallthru
          _
        // Predicated region
        $region85: #{tpu_custom_call.1} parent=43 // pred_check
          %p921 = pneg %p256
        $region86: #{tpu_custom_call.1} parent=43 // pred_check_branch
          %923 = sbr.rel (%p921) target = $region88
        $region87: #{tpu_custom_call.1} parent=43 // pred_region
          %924 = dma.done [#allocation16], 128
        $region88: #{tpu_custom_call.1} parent=43 // pred_fallthru
          _
      $region44: #{tpu_custom_call.1} parent=5 // pred_fallthru
        _
      %p925 = scmp.le.s32.totalorder 2, %s24
      // Predicated region
      $region89: #{tpu_custom_call.1} parent=5 // pred_check
        %p926 = pneg %p925
      $region90: #{tpu_custom_call.1} parent=5 // pred_check_branch
        %928 = sbr.rel (%p926) target = $region92
      $region91: #{tpu_custom_call.1} parent=5 // pred_region
        %s929 = ssub.s32 %s24, 2
        // Predicated region
        $region93: #{tpu_custom_call.1} parent=91 // pred_check
          %p930 = pneg %p210
        $region94: #{tpu_custom_call.1} parent=91 // pred_check_branch
          %932 = sbr.rel (%p930) target = $region96
        $region95: #{tpu_custom_call.1} parent=91 // pred_region
          %s933 = sand.u32 %s195, 1
          %s934 = scalar_lea.sflag [#allocation7], %s933
          %s935 = sand.u32 %s195, 1
          %s936 = smul.addr %s935, 32
          %s937 = scalar_lea.vmem [#allocation14], %s936
          %938 = dma.done %s934, 512
        $region96: #{tpu_custom_call.1} parent=91 // pred_fallthru
          _
      $region92: #{tpu_custom_call.1} parent=5 // pred_fallthru
        _
    $region6: #{tpu_custom_call.1} parent=1 // loop_footer
      %s28 = sadd.s32 1, %s24
    $region7: #{tpu_custom_call.1} parent=1 // loop_footer_branch
      %23 = sbr.rel target = $region3
    $region8: #{tpu_custom_call.1} parent=1 // loop_exit
      _
    %939 = vsyncpa [#allocation6], 1
    %s940 = scalar_lea.sflag [#allocation6], 1
    %941 = vsyncpa %s940, 1
    %942 = vsyncpa [#allocation9], 1
    %943 = vsyncpa [#allocation12], 1
    %944 = vsyncpa [#allocation7], 1
    %s945 = scalar_lea.sflag [#allocation7], 1
    %946 = vsyncpa %s945, 1
    %947 = vsyncpa [#allocation16], 1

</llo_original>
